<compile_context>
chip_gen: v7x
topology: tpu7x:2x2x1
jax: 0.10.0
libtpu: 0.0.40
codegen_flags: <defaults>
</compile_context>

<pallas_src>
import jax
import jax.numpy as jnp
from jax import lax
from jax.experimental import pallas as pl
from jax.experimental.pallas import tpu as pltpu


_LANE = 128
# Safe on v5e/v6e (128 MiB physical) and v7x (64 MiB physical).
_VMEM_LIMIT = 32 * 1024 * 1024
# Tile-sizing target; leaves headroom under the scoped limit.
_VMEM_BUDGET = 24 * 1024 * 1024


def _round_up(x, m):
    return ((x + m - 1) // m) * m


def _largest_divisor_leq(n, cap):
    cap = int(max(1, min(cap, n)))
    for d in range(cap, 0, -1):
        if n % d == 0:
            return d
    return 1


# ----------------------------------------------------------------------------
# Kernel A: ConvTranspose2d(kernel=2, stride=2) == one matmul per input pixel,
# written directly into the 2x-upsampled NHWC layout.
# ----------------------------------------------------------------------------
def _upsample_k2s2_kernel(x_ref, w_ref, b_ref, o_ref):
    # x_ref: (1, TR, W, Cin)   w_ref: (Cin, 4*Cp) columns ordered (ki, kj, cout)
    # b_ref: (1, 2*Cp) ordered (kj, cout)
    # o_ref: (TR, 2, 2*W, Cp)  -- dim 1 is the output-row parity ki.
    tr, _, two_w, cp = o_ref.shape
    w_cols = two_w // 2
    cin = x_ref.shape[3]
    xm = x_ref[0].reshape(tr * w_cols, cin)
    b = b_ref[...]                                       # (1, 2*Cp), f32
    # Single MXU push for both row parities (K = Cin, N = 4*Cp).
    r = jnp.dot(xm, w_ref[...], preferred_element_type=jnp.float32)
    for ki in range(2):
        half = r[:, ki * 2 * cp:(ki + 1) * 2 * cp] + b   # lane-aligned slice
        # (TR*W, 2*Cp) -> (TR, 1, 2W, Cp): column block kj lands at output col 2j+kj.
        o_ref[:, ki:ki + 1, :, :] = half.reshape(tr, 1, two_w, cp).astype(o_ref.dtype)


def conv_transpose_2x2_s2(x_nhwc, wt_iohw, bias, *, cout_pad,
                          compute_dtype=jnp.float32):
    """ConvTranspose2d(Cin, Cout, kernel_size=2, stride=2) in NHWC.

    wt_iohw: torch layout (Cin, Cout, 2, 2); bias: (Cout,).
    Returns (N, 2H, 2W, cout_pad) with channels >= Cout zero-filled.
    """
    # TODO(synk): general upsample_size != 2 (overlapping transposed-conv taps) is not
    #             implemented; the module is exercised with upsample_size=2.
    N, H, W, Cin = x_nhwc.shape
    Cout = wt_iohw.shape[1]
    cp = cout_pad
    bpe = jnp.dtype(compute_dtype).itemsize

    # (cin, cout, ki, kj) -> (cin, ki, kj, cout) -> (Cin, 4*Cp): one matmul covers
    # both row parities; column order (ki, kj, cout).
    w = jnp.transpose(wt_iohw, (0, 2, 3, 1))
    w = jnp.pad(w, ((0, 0), (0, 0), (0, 0), (0, cp - Cout)))
    w = w.reshape(Cin, 4 * cp).astype(compute_dtype)
    b = jnp.pad(bias, (0, cp - Cout))
    b = jnp.concatenate([b, b]).reshape(1, 2 * cp).astype(jnp.float32)
    x = x_nhwc.astype(compute_dtype)

    # Adaptive row tile: biggest divisor of H whose working set fits the VMEM budget.
    per_row = (2 * W * Cin + 2 * (2 * 2 * W * cp)) * bpe + W * 4 * cp * 4
    fixed = (2 * Cin * 4 * cp + 2 * cp) * bpe
    cap = max(1, max(_VMEM_BUDGET - fixed, per_row) // per_row)
    tr = _largest_divisor_leq(H, cap)
    n_t = H // tr

    out4 = pl.pallas_call(
        _upsample_k2s2_kernel,
        out_shape=jax.ShapeDtypeStruct((N * H, 2, 2 * W, cp), compute_dtype),
        grid=(N, n_t),
        in_specs=[
            pl.BlockSpec((1, tr, W, Cin), lambda n, t: (n, t, 0, 0)),
            pl.BlockSpec((Cin, 4 * cp), lambda n, t: (0, 0)),
            pl.BlockSpec((1, 2 * cp), lambda n, t: (0, 0)),
        ],
        out_specs=pl.BlockSpec((tr, 2, 2 * W, cp),
                               lambda n, t, n_t=n_t: (n * n_t + t, 0, 0, 0)),
        compiler_params=pltpu.CompilerParams(
            dimension_semantics=("parallel", "parallel"),
            vmem_limit_bytes=_VMEM_LIMIT),
    )(x, w, b)
    # (N*H, 2, 2W, Cp) -> (N, 2H, 2W, Cp): contiguous merge, free (no data movement).
    return out4.reshape(N, 2 * H, 2 * W, cp)


# ----------------------------------------------------------------------------
# Kernel B: fused 3x3 conv (+ folded-BN bias + ReLU) over an implicit channel
# concat of n_inputs activations, as a single im2col matmul (K = 9 * sum(Cin_i)).
# ----------------------------------------------------------------------------
def _make_conv3x3_bias_relu_kernel(n_inputs):
    def kernel(*refs):
        x_refs = refs[:3 * n_inputs]                  # (main, halo_row0, halo_row1) per input
        w_ref, b_ref, o_ref = refs[3 * n_inputs:]
        _, th, wo, cp = o_ref.shape
        slabs = []
        for i in range(n_inputs):
            main, h1, h2 = x_refs[3 * i:3 * i + 3]
            cin = main.shape[3]
            # (TH+2, Wo+2, Cin) window of the spatially padded input (halo included).
            win = jnp.concatenate([main[0], h1[0], h2[0]], axis=0)
            for ki in range(3):
                for kj in range(3):
                    slabs.append(
                        win[ki:ki + th, kj:kj + wo, :].reshape(th * wo, cin))
        # Lane-aligned im2col patch: ONE MXU matmul instead of 9 (or 18) tiny-K matmuls.
        patch = jnp.concatenate(slabs, axis=-1)       # (TH*Wo, K)
        acc = jnp.dot(patch, w_ref[...], preferred_element_type=jnp.float32)
        y = jnp.maximum(acc + b_ref[...], 0.0)        # BN scale already folded into w
        o_ref[...] = y.reshape(1, th, wo, cp).astype(o_ref.dtype)
    return kernel


def conv3x3_bn_relu_fused(inputs, w_parts, conv_b, gamma, beta, mean, var, *,
                          eps=1e-5, compute_dtype=jnp.float32):
    """Conv2d(k=3, s=1, p=1) over cat(inputs, channel) -> BatchNorm2d (inference) -> ReLU.

    inputs:  list of NHWC activations (the channel split of the concatenated input).
    w_parts: matching list of torch-layout (Cout, Cin_i, 3, 3) weight slices.
    Returns (N, H, W, Cout_pad) with Cout_pad = round_up(Cout, 128); pad channels are 0.
    """
    N, Hd, Wd = inputs[0].shape[:3]
    cout = w_parts[0].shape[0]
    cp = _round_up(cout, _LANE)
    bpe = jnp.dtype(compute_dtype).itemsize

    # Fold BatchNorm scale into the conv weights; only bias-add + ReLU stays in-kernel.
    scale = gamma / jnp.sqrt(var + eps)
    bias = beta + (conv_b - mean) * scale
    bias = jnp.pad(bias, (0, cp - cout)).reshape(1, cp).astype(jnp.float32)

    ci_pads = [_round_up(x.shape[3], _LANE) for x in inputs]
    wp = Wd + 2
    k_total = 9 * sum(ci_pads)

    # Adaptive row tile: biggest divisor of Hd whose double-buffered working set
    # (inputs + halos + weight + output + im2col patch) fits the VMEM budget.
    per_row = (2 * wp * sum(ci_pads) + 2 * Wd * cp) * bpe + Wd * (k_total + cp) * 4
    fixed = (2 * k_total * cp + cp) * bpe + 2 * 2 * wp * sum(ci_pads) * bpe
    cap = max(1, max(_VMEM_BUDGET - fixed, per_row) // per_row)
    th = _largest_divisor_leq(Hd, cap)

    in_specs, call_args, w_blocks = [], [], []
    for x, w_oihw, ci_pad in zip(inputs, w_parts, ci_pads):
        ci_act = x.shape[3]
        ci_w = w_oihw.shape[1]
        # spatial pad=1 for the conv, channels zero-padded to a lane-aligned width.
        xp = jnp.pad(x, ((0, 0), (1, 1), (1, 1), (0, ci_pad - ci_act)))
        xp = xp.astype(compute_dtype)
        # (3,3,Cin,Cout)*scale -> zero-pad -> (9*ci_pad, cp); row order (ki, kj, cin)
        # matches the slab order built inside the kernel.
        w = jnp.transpose(w_oihw, (2, 3, 1, 0)) * scale[None, None, None, :]
        w = jnp.pad(w, ((0, 0), (0, 0), (0, ci_pad - ci_w), (0, cp - cout)))
        w_blocks.append(w.reshape(9 * ci_pad, cp))
        # main TH-row block + two 1-row halo blocks (all auto-pipelined BlockSpecs).
        in_specs += [
            pl.BlockSpec((1, th, wp, ci_pad), lambda n, t: (n, t, 0, 0)),
            pl.BlockSpec((1, 1, wp, ci_pad),
                         lambda n, t, th=th: (n, t * th + th, 0, 0)),
            pl.BlockSpec((1, 1, wp, ci_pad),
                         lambda n, t, th=th: (n, t * th + th + 1, 0, 0)),
        ]
        call_args += [xp, xp, xp]

    w_all = jnp.concatenate(w_blocks, axis=0).astype(compute_dtype)
    in_specs += [
        pl.BlockSpec(w_all.shape, lambda n, t: (0, 0)),
        pl.BlockSpec(bias.shape, lambda n, t: (0, 0)),
    ]
    call_args += [w_all, bias]

    return pl.pallas_call(
        _make_conv3x3_bias_relu_kernel(len(inputs)),
        out_shape=jax.ShapeDtypeStruct((N, Hd, Wd, cp), compute_dtype),
        grid=(N, Hd // th),
        in_specs=in_specs,
        out_specs=pl.BlockSpec((1, th, Wd, cp), lambda n, t: (n, t, 0, 0)),
        compiler_params=pltpu.CompilerParams(
            dimension_semantics=("parallel", "parallel"),
            vmem_limit_bytes=_VMEM_LIMIT),
    )(*call_args)


# ----------------------------------------------------------------------------
# Decoder_block forward
# ----------------------------------------------------------------------------
def decoder_block_forward(params, x_nhwc, down_nhwc, *, compute_dtype=jnp.float32):
    """Decoder_block.forward: upSample -> crop_concat -> ConvBnRelu x2 (NHWC, eval)."""
    cout = params["up_w"].shape[1]
    cd = down_nhwc.shape[3]
    cp = _round_up(cout, _LANE)

    # upSample (ConvTranspose2d k=2 s=2); already channel-padded to cp and in final layout.
    up = conv_transpose_2x2_s2(x_nhwc, params["up_w"], params["up_b"],
                               cout_pad=cp, compute_dtype=compute_dtype)

    # _crop_concat: F.pad(upsampled, (0, w, 0, h)) to down's (H, W).  The channel concat
    # itself is fused into convr1 below (conv over a concat == sum of two convs).
    Hd, Wd = down_nhwc.shape[1], down_nhwc.shape[2]
    up = up[:, :Hd, :Wd, :]
    ph, pw = Hd - up.shape[1], Wd - up.shape[2]
    if ph > 0 or pw > 0:
        up = jnp.pad(up, ((0, 0), (0, ph), (0, pw), (0, 0)))

    # convr1: split the conv weight along Cin; torch concat order is (down, up).
    y = conv3x3_bn_relu_fused(
        [down_nhwc, up],
        [params["c1_w"][:, :cd], params["c1_w"][:, cd:]],
        params["c1_b"], params["bn1_g"], params["bn1_b"],
        params["bn1_m"], params["bn1_v"], compute_dtype=compute_dtype)
    # drop_out: eval-mode Dropout2d is the identity -> omitted.

    # convr2
    y = conv3x3_bn_relu_fused(
        [y], [params["c2_w"]],
        params["c2_b"], params["bn2_g"], params["bn2_b"],
        params["bn2_m"], params["bn2_v"], compute_dtype=compute_dtype)

    return y[:, :, :, :cout].astype(jnp.float32)


# ----------------------------------------------------------------------------
# Pure-JAX reference (for correctness check against the Pallas kernels)
# ----------------------------------------------------------------------------
def reference_forward(params, x_nhwc, down_nhwc, eps=1e-5):
    N, H, W, _ = x_nhwc.shape
    Cout = params["up_w"].shape[1]
    # ConvTranspose2d k=2 s=2 (no overlap): out[n,2i+k,2j+l,o] = sum_c x[n,i,j,c] W[c,o,k,l]
    t = jnp.einsum("nijc,cokl->nikjlo", x_nhwc, params["up_w"])
    up = t.reshape(N, 2 * H, 2 * W, Cout) + params["up_b"]

    Hd, Wd = down_nhwc.shape[1], down_nhwc.shape[2]
    up = up[:, :Hd, :Wd, :]
    up = jnp.pad(up, ((0, 0), (0, max(Hd - up.shape[1], 0)),
                      (0, max(Wd - up.shape[2], 0)), (0, 0)))
    cat = jnp.concatenate([down_nhwc, up], axis=-1)

    def cbr(x, w_oihw, cb, g, b, m, v):
        w_hwio = jnp.transpose(w_oihw, (2, 3, 1, 0))
        y = lax.conv_general_dilated(
            x, w_hwio, (1, 1), ((1, 1), (1, 1)),
            dimension_numbers=("NHWC", "HWIO", "NHWC")) + cb
        y = (y - m) / jnp.sqrt(v + eps) * g + b
        return jnp.maximum(y, 0.0)

    y = cbr(cat, params["c1_w"], params["c1_b"], params["bn1_g"],
            params["bn1_b"], params["bn1_m"], params["bn1_v"])
    y = cbr(y, params["c2_w"], params["c2_b"], params["bn2_g"],
            params["bn2_b"], params["bn2_m"], params["bn2_v"])
    return y


# ----------------------------------------------------------------------------
# Deterministic parameter init + run
# ----------------------------------------------------------------------------
def make_params(key, in_channels, out_channels, upsample_size=2):
    ks = jax.random.split(key, 12)
    return {
        # ConvTranspose2d(in, out, k=upsample_size, s=2): weight (Cin, Cout, k, k)
        "up_w": 0.1 * jax.random.normal(
            ks[0], (in_channels, out_channels, upsample_size, upsample_size),
            jnp.float32),
        "up_b": 0.05 * jax.random.normal(ks[1], (out_channels,), jnp.float32),
        # Conv2d(in, out, 3) weight (Cout, Cin, 3, 3)
        "c1_w": 0.1 * jax.random.normal(
            ks[2], (out_channels, in_channels, 3, 3), jnp.float32),
        "c1_b": 0.05 * jax.random.normal(ks[3], (out_channels,), jnp.float32),
        "bn1_g": 1.0 + 0.1 * jax.random.normal(ks[4], (out_channels,), jnp.float32),
        "bn1_b": 0.1 * jax.random.normal(ks[5], (out_channels,), jnp.float32),
        "bn1_m": 0.1 * jax.random.normal(ks[6], (out_channels,), jnp.float32),
        "bn1_v": 1.0 + 0.1 * jax.random.uniform(ks[7], (out_channels,), jnp.float32),
        # Conv2d(out, out, 3)
        "c2_w": 0.1 * jax.random.normal(
            ks[8], (out_channels, out_channels, 3, 3), jnp.float32),
        "c2_b": 0.05 * jax.random.normal(ks[9], (out_channels,), jnp.float32),
        "bn2_g": 1.0 + 0.1 * jax.random.normal(ks[10], (out_channels,), jnp.float32),
        "bn2_b": 0.1 * jax.random.normal(ks[11], (out_channels,), jnp.float32),
        "bn2_m": jnp.zeros((out_channels,), jnp.float32),
        "bn2_v": jnp.ones((out_channels,), jnp.float32),
    }


if __name__ == "__main__":
    # Small UNet-decoder shapes: in_channels = 2 * out_channels (skip concat).
    N = 2
    in_channels = 8
    out_channels = 4
    H = W = 8           # coarse (bottom) spatial size; down is (N, 16, 16, 4)
    upsample_size = 2

    key = jax.random.PRNGKey(0)
    kx, kd, kp = jax.random.split(key, 3)
    x = jax.random.normal(kx, (N, H, W, in_channels), jnp.float32)
    down = jax.random.normal(kd, (N, 2 * H, 2 * W, out_channels), jnp.float32)
    params = make_params(kp, in_channels, out_channels, upsample_size)

    ref = jax.block_until_ready(reference_forward(params, x, down))

    # f32 path (tight check).
    out = jax.block_until_ready(decoder_block_forward(params, x, down))
    assert out.shape == (N, 2 * H, 2 * W, out_channels), out.shape
    assert jnp.allclose(out, ref, atol=1e-3, rtol=1e-3), (
        float(jnp.max(jnp.abs(out - ref))))

    # bf16-MXU path (f32 accumulation), loose check -- the v6e/v7x fast path.
    out_bf16 = jax.block_until_ready(
        decoder_block_forward(params, x, down, compute_dtype=jnp.bfloat16))
    assert jnp.allclose(out_bf16, ref, atol=2e-1, rtol=2e-1), (
        float(jnp.max(jnp.abs(out_bf16 - ref))))

    print("KERNEL_OK")
</pallas_src>

<mosaic_0001>
module attributes {stable_mosaic.version = 11 : i64} {
  func.func @_upsample_k2s2_kernel(%arg0: i32, %arg1: i32, %arg2: memref<1x8x8x8xf32, #tpu.memory_space<vmem>>, %arg3: memref<8x512xf32, #tpu.memory_space<vmem>>, %arg4: memref<1x256xf32, #tpu.memory_space<vmem>>, %arg5: memref<8x2x16x128xf32, #tpu.memory_space<vmem>>) attributes {dimension_semantics = [#tpu.dimension_semantics<parallel>, #tpu.dimension_semantics<parallel>], iteration_bounds = array<i64: 2, 1>, scalar_prefetch = 0 : i64, scratch_operands = 0 : i64, tpu.core_type = #tpu.core_type<tc>, window_params = [{transform_indices = @transform_0, window_bounds = array<i64: 1, 8, 8, 8>}, {pipeline_mode = #tpu.pipeline_mode<synchronous>, transform_indices = @transform_1, window_bounds = array<i64: 8, 512>}, {pipeline_mode = #tpu.pipeline_mode<synchronous>, transform_indices = @transform_2, window_bounds = array<i64: 1, 256>}, {transform_indices = @transform_3, window_bounds = array<i64: 8, 2, 16, 128>}]} {
    %c0 = arith.constant 0 : index
    %c0_0 = arith.constant 0 : index
    %c0_1 = arith.constant 0 : index
    %c0_2 = arith.constant 0 : index
    %0 = vector.load %arg2[%c0, %c0_0, %c0_1, %c0_2] : memref<1x8x8x8xf32, #tpu.memory_space<vmem>>, vector<1x8x8x8xf32>
    %1 = vector.shape_cast %0 : vector<1x8x8x8xf32> to vector<8x8x8xf32>
    %2 = vector.shape_cast %1 : vector<8x8x8xf32> to vector<64x8xf32>
    %c0_3 = arith.constant 0 : index
    %c0_4 = arith.constant 0 : index
    %3 = vector.load %arg4[%c0_3, %c0_4] : memref<1x256xf32, #tpu.memory_space<vmem>>, vector<1x256xf32>
    %c0_5 = arith.constant 0 : index
    %c0_6 = arith.constant 0 : index
    %4 = vector.load %arg3[%c0_5, %c0_6] : memref<8x512xf32, #tpu.memory_space<vmem>>, vector<8x512xf32>
    %cst = arith.constant dense<0.000000e+00> : vector<64x512xf32>
    %5 = tpu.matmul %2, %4, %cst {dimension_numbers = #tpu.dot_dimension_numbers<[1], [0], [0], [1], [0, 0, 1, 1], [], []>} : vector<64x8xf32>, vector<8x512xf32>, vector<64x512xf32> -> vector<64x512xf32>
    %6 = vector.extract_strided_slice %5 {offsets = [0, 0], sizes = [64, 256], strides = [1, 1]} : vector<64x512xf32> to vector<64x256xf32>
    %7 = vector.broadcast %3 : vector<1x256xf32> to vector<64x256xf32>
    %8 = arith.addf %6, %7 : vector<64x256xf32>
    %9 = vector.shape_cast %8 : vector<64x256xf32> to vector<8x1x16x128xf32>
    %c0_7 = arith.constant 0 : index
    %c0_8 = arith.constant 0 : index
    %c0_9 = arith.constant 0 : index
    %c0_10 = arith.constant 0 : index
    %10 = vector.load %arg5[%c0_7, %c0_8, %c0_9, %c0_10] : memref<8x2x16x128xf32, #tpu.memory_space<vmem>>, vector<8x1x16x128xf32>
    tpu.vector_store %arg5[%c0_7, %c0_8, %c0_9, %c0_10], %9 {strides = array<i32>} : memref<8x2x16x128xf32, #tpu.memory_space<vmem>>, vector<8x1x16x128xf32>,
    %11 = vector.extract_strided_slice %5 {offsets = [0, 256], sizes = [64, 256], strides = [1, 1]} : vector<64x512xf32> to vector<64x256xf32>
    %12 = vector.broadcast %3 : vector<1x256xf32> to vector<64x256xf32>
    %13 = arith.addf %11, %12 : vector<64x256xf32>
    %14 = vector.shape_cast %13 : vector<64x256xf32> to vector<8x1x16x128xf32>
    %c0_11 = arith.constant 0 : index
    %c1 = arith.constant 1 : index
    %c0_12 = arith.constant 0 : index
    %c0_13 = arith.constant 0 : index
    %15 = vector.load %arg5[%c0_11, %c1, %c0_12, %c0_13] : memref<8x2x16x128xf32, #tpu.memory_space<vmem>>, vector<8x1x16x128xf32>
    tpu.vector_store %arg5[%c0_11, %c1, %c0_12, %c0_13], %14 {strides = array<i32>} : memref<8x2x16x128xf32, #tpu.memory_space<vmem>>, vector<8x1x16x128xf32>,
    return
  }
  func.func @transform_0(%arg0: i32, %arg1: i32) -> (i32, i32, i32, i32) {
    %c0_i32 = arith.constant 0 : i32
    %c0_i32_0 = arith.constant 0 : i32
    %c0_i32_1 = arith.constant 0 : i32
    return %arg0, %arg1, %c0_i32, %c0_i32_0 : i32, i32, i32, i32
  }
  func.func @transform_1(%arg0: i32, %arg1: i32) -> (i32, i32) {
    %c0_i32 = arith.constant 0 : i32
    %c0_i32_0 = arith.constant 0 : i32
    %c0_i32_1 = arith.constant 0 : i32
    return %c0_i32, %c0_i32_0 : i32, i32
  }
  func.func @transform_2(%arg0: i32, %arg1: i32) -> (i32, i32) {
    %c0_i32 = arith.constant 0 : i32
    %c0_i32_0 = arith.constant 0 : i32
    %c0_i32_1 = arith.constant 0 : i32
    return %c0_i32, %c0_i32_0 : i32, i32
  }
  func.func @transform_3(%arg0: i32, %arg1: i32) -> (i32, i32, i32, i32) {
    %c1_i32 = arith.constant 1 : i32
    %0 = arith.muli %arg0, %c1_i32 : i32
    %1 = arith.addi %0, %arg1 : i32
    %c0_i32 = arith.constant 0 : i32
    %c0_i32_0 = arith.constant 0 : i32
    %c0_i32_1 = arith.constant 0 : i32
    %c0_i32_2 = arith.constant 0 : i32
    return %1, %c0_i32, %c0_i32_0, %c0_i32_1 : i32, i32, i32, i32
  }
}

</mosaic_0001>

<llo_original>
// kernel: tpu_custom_call.1
$region0: #{tpu_custom_call.1}
  #allocation0 [shape = 'u32[]', space=smem, size = 0x4, offset = 0x4, fixed_abs, tag = 'smem constant byte address 0x4 - core index']
  #allocation1 [shape = 'u32[144,128]{1,0:T(1,128)}', space=vmem, size = 0x12000, scoped, tag = 'internal scratch']
  %s0 = inlined_call_operand.hbm [shape: f32[2,8,8,8], index: 0, kind: input, shape index: {}]
  %s1 = inlined_call_operand.hbm [shape: f32[8,512], index: 1, kind: input, shape index: {}]
  %s2 = inlined_call_operand.vmem [shape: f32[1,256], index: 2, kind: input, shape index: {}]
  %s3 = inlined_call_operand.hbm [shape: f32[16,2,16,128], index: 3, kind: output, shape index: {}]
  %s4 = sld [smem:[#allocation0]]
  $region53: #{tpu_custom_call.1} parent=0
    _
  %s6 = ssub.s32 1, %s4
  %s7 = scalar_select 0, %s6, %s4
  $region1: #{tpu_custom_call.1} parent=0
    #allocation2 [shape = 'u8[65536]{0}', space=vmem, size = 0x10000, scoped, tag = 'input window, operand 0']
    #allocation3 [shape = 's32[2]{0}', space=sflag, size = 0x8, scoped, tag = 'scoped memory for tpu_custom_call.1']
    #allocation4 [shape = 's32[2]{0}', space=sflag, size = 0x8, scoped, tag = 'scoped memory for tpu_custom_call.1']
    #allocation5 [shape = 'u8[16384]{0}', space=vmem, size = 0x4000, scoped, tag = 'input window, operand 1, single buffered']
    #allocation6 [shape = 's32[1]{0}', space=sflag, size = 0x4, scoped, tag = 'scoped memory for tpu_custom_call.1']
    #allocation7 [shape = 'u8[262144]{0}', space=vmem, size = 0x40000, scoped, tag = 'output window, operand 0']
    %8 = vsyncpa [#allocation3], 0
    %s9 = scalar_lea.sflag [#allocation3], 1
    %10 = vsyncpa %s9, 0
    %11 = vsyncpa [#allocation6], 0
    %12 = vsyncpa [#allocation4], 0
    %s13 = scalar_lea.sflag [#allocation4], 1
    %14 = vsyncpa %s13, 0
    loop: start=0, step=1, limit=4
    $region2: #{tpu_custom_call.1} parent=1 // loop_pre_header
      _
    $region3: #{tpu_custom_call.1} parent=1 // loop_header
      %s16 = sphi 0, %s20
      %p17 = scmp.ge.s32.totalorder %s16, 4
      %s23 = sphi 0, %s35
      %s24 = sphi 0, %s31
      %s25 = sphi 0, %s23
      %s26 = sphi 0, %s24
      %s27 = sphi 0, %s25
      %s28 = sphi 0, %s26
      %s40 = sphi 0, %s42
      %s43 = sphi 0, %s40
      %s44 = sphi 0, %s43
      %s60 = sphi 0, %s44
      %s64 = sphi 0, %s64
      %s66 = sphi 0, %s64
      %s67 = sphi 0, %s66
      %s81 = sphi 0, %s67
      %s85 = sphi 0, %s85
      %s87 = sphi 0, %s85
      %s88 = sphi 0, %s87
      %s102 = sphi 0, %s88
      %s110 = sphi 0, %s112
      %s113 = sphi 0, %s110
      %s114 = sphi 0, %s113
      %s130 = sphi 0, %s114
    $region4: #{tpu_custom_call.1} parent=1 // loop_header_branch
      %19 = sbr.rel (%p17) target = $region8
    $region5: #{tpu_custom_call.1} parent=1 // loop_body
      %s21 = ssub.s32 %s16, 1
      %s22 = ssub.s32 %s16, 2
      %s29 = sadd.s32 1, %s24
      %p30 = scmp.ge.s32.totalorder %s29, 1
      %s31 = scalar_select %p30, 0, %s29
      %s32 = sadd.s32 1, %s23
      %s33 = scalar_select %p30, %s32, %s23
      %p34 = scmp.ge.s32.totalorder %s33, 2
      %s35 = scalar_select %p34, 0, %s33
      %s36 = ssub.s32 %s23, %s35
      %s37 = ssub.s32 %s24, %s31
      %s38 = sor.u32 %s36, %s37
      %p39 = scmp.eq.s32.totalorder %s38, 0
      %s41 = sadd.s32 %s40, 1
      %s42 = scalar_select %p39, %s40, %s41
      %p45 = pneg %p39
      %p46 = scmp.eq.s32.totalorder %s16, 1
      %p47 = por %p45, %p46
      %p48 = scmp.ne.s32.totalorder %s40, %s43
      %p49 = scmp.eq.s32.totalorder %s16, 0
      %p50 = por %p48, %p49
      %p51 = scmp.ne.s32.totalorder %s40, %s43
      %p52 = scmp.eq.s32.totalorder %s21, 1
      %p53 = por %p51, %p52
      %p54 = scmp.ne.s32.totalorder %s43, %s44
      %p55 = scmp.eq.s32.totalorder %s21, 0
      %p56 = por %p54, %p55
      %p57 = scmp.ne.s32.totalorder %s43, %s44
      %p58 = scmp.eq.s32.totalorder %s22, 1
      %p59 = por %p57, %p58
      %p61 = scmp.ne.s32.totalorder %s44, %s60
      %p62 = scmp.eq.s32.totalorder %s22, 0
      %p63 = por %p61, %p62
      %s65 = sadd.s32 %s64, 1
      %p68 = scmp.eq.s32.totalorder %s16, 1
      %p69 = scmp.ne.s32.totalorder %s64, %s66
      %p70 = scmp.eq.s32.totalorder %s16, 0
      %p71 = por %p69, %p70
      %p72 = scmp.ne.s32.totalorder %s64, %s66
      %p73 = scmp.eq.s32.totalorder %s21, 1
      %p74 = por %p72, %p73
      %p75 = scmp.ne.s32.totalorder %s66, %s67
      %p76 = scmp.eq.s32.totalorder %s21, 0
      %p77 = por %p75, %p76
      %p78 = scmp.ne.s32.totalorder %s66, %s67
      %p79 = scmp.eq.s32.totalorder %s22, 1
      %p80 = por %p78, %p79
      %p82 = scmp.ne.s32.totalorder %s67, %s81
      %p83 = scmp.eq.s32.totalorder %s22, 0
      %p84 = por %p82, %p83
      %s86 = sadd.s32 %s85, 1
      %p89 = scmp.eq.s32.totalorder %s16, 1
      %p90 = scmp.ne.s32.totalorder %s85, %s87
      %p91 = scmp.eq.s32.totalorder %s16, 0
      %p92 = por %p90, %p91
      %p93 = scmp.ne.s32.totalorder %s85, %s87
      %p94 = scmp.eq.s32.totalorder %s21, 1
      %p95 = por %p93, %p94
      %p96 = scmp.ne.s32.totalorder %s87, %s88
      %p97 = scmp.eq.s32.totalorder %s21, 0
      %p98 = por %p96, %p97
      %p99 = scmp.ne.s32.totalorder %s87, %s88
      %p100 = scmp.eq.s32.totalorder %s22, 1
      %p101 = por %p99, %p100
      %p103 = scmp.ne.s32.totalorder %s88, %s102
      %p104 = scmp.eq.s32.totalorder %s22, 0
      %p105 = por %p103, %p104
      %s106 = sadd.s32 %s23, %s24
      %s107 = sadd.s32 %s35, %s31
      %s108 = ssub.s32 %s106, %s107
      %p109 = scmp.eq.s32.totalorder %s108, 0
      %s111 = sadd.s32 %s110, 1
      %s112 = scalar_select %p109, %s110, %s111
      %p115 = pneg %p109
      %p116 = scmp.eq.s32.totalorder %s16, 1
      %p117 = por %p115, %p116
      %p118 = scmp.ne.s32.totalorder %s110, %s113
      %p119 = scmp.eq.s32.totalorder %s16, 0
      %p120 = por %p118, %p119
      %p121 = scmp.ne.s32.totalorder %s110, %s113
      %p122 = scmp.eq.s32.totalorder %s21, 1
      %p123 = por %p121, %p122
      %p124 = scmp.ne.s32.totalorder %s113, %s114
      %p125 = scmp.eq.s32.totalorder %s21, 0
      %p126 = por %p124, %p125
      %p127 = scmp.ne.s32.totalorder %s113, %s114
      %p128 = scmp.eq.s32.totalorder %s22, 1
      %p129 = por %p127, %p128
      %p131 = scmp.ne.s32.totalorder %s114, %s130
      %p132 = scmp.eq.s32.totalorder %s22, 0
      %p133 = por %p131, %p132
      %p134 = scmp.le.s32.totalorder 1, %s16
      %p135 = scmp.lt.s32.totalorder %s16, 3
      %p136 = pnand %p134, %p135
      %p137 = pneg %p136
      // Predicated region
      $region9: #{tpu_custom_call.1} parent=5 // pred_check
        _
      $region10: #{tpu_custom_call.1} parent=5 // pred_check_branch
        %139 = sbr.rel (%p136) target = $region12
      $region11: #{tpu_custom_call.1} parent=5 // pred_region
        %s140 = ssub.s32 %s16, 1
        // Predicated region
        $region13: #{tpu_custom_call.1} parent=11 // pred_check
          %p141 = pneg %p77
        $region14: #{tpu_custom_call.1} parent=11 // pred_check_branch
          %143 = sbr.rel (%p141) target = $region16
        $region15: #{tpu_custom_call.1} parent=11 // pred_region
          %s145 = ssub.s32 512, 512
          %146 = vsyncadd [#allocation6], %s145
          %s148 = sshll.u32 [#allocation5], 4
          %s149 = int_to_ptr.vmem [resolvable:$true] %s148
          %151 = dma.hbm_to_vmem [thread:$0]  %s1, 512, %s149, [#allocation6]
        $region16: #{tpu_custom_call.1} parent=11 // pred_fallthru
          _
        // Predicated region
        $region17: #{tpu_custom_call.1} parent=11 // pred_check
          %p152 = pneg %p98
        $region18: #{tpu_custom_call.1} parent=11 // pred_check_branch
          %154 = sbr.rel (%p152) target = $region20
        $region19: #{tpu_custom_call.1} parent=11 // pred_region
          _
        $region20: #{tpu_custom_call.1} parent=11 // pred_fallthru
          _
      $region12: #{tpu_custom_call.1} parent=5 // pred_fallthru
        _
      %p155 = scmp.lt.s32.totalorder %s16, 2
      // Predicated region
      $region21: #{tpu_custom_call.1} parent=5 // pred_check
        %p156 = pneg %p155
      $region22: #{tpu_custom_call.1} parent=5 // pred_check_branch
        %158 = sbr.rel (%p156) target = $region24
      $region23: #{tpu_custom_call.1} parent=5 // pred_region
        // Predicated region
        $region25: #{tpu_custom_call.1} parent=23 // pred_check
          %p159 = pneg %p50
        $region26: #{tpu_custom_call.1} parent=23 // pred_check_branch
          %161 = sbr.rel (%p159) target = $region28
        $region27: #{tpu_custom_call.1} parent=23 // pred_region
          %s162 = sand.u32 %s40, 1
          %s163 = scalar_lea.sflag [#allocation3], %s162
          %s164 = sand.u32 %s40, 1
          %s165 = smul.addr %s164, 64
          %s166 = scalar_lea.vmem [#allocation2], %s165
          %s167 = smul.u32 8, %s24
          %s169 = ssub.s32 1024, 1024
          %170 = vsyncadd %s163, %s169
          %s171 = smul.addr %s23, 8
          %s172 = sadd.s32 %s167, %s171
          %s173 = smul.addr %s172, 128
          %s174 = scalar_lea.hbm %s0, %s173
          %s175 = sshll.u32 %s166, 4
          %s176 = int_to_ptr.vmem [resolvable:$true] %s175
          %181 = dma.hbm_to_vmem [thread:$0]  %s174, 1024, %s176, %s163, 128, 128, 8
        $region28: #{tpu_custom_call.1} parent=23 // pred_fallthru
          _
      $region24: #{tpu_custom_call.1} parent=5 // pred_fallthru
        _
      %p182 = scmp.le.s32.totalorder 1, %s16
      %p183 = scmp.lt.s32.totalorder %s16, 3
      %p184 = pnand %p182, %p183
      %p185 = pneg %p184
      // Predicated region
      $region29: #{tpu_custom_call.1} parent=5 // pred_check
        _
      $region30: #{tpu_custom_call.1} parent=5 // pred_check_branch
        %187 = sbr.rel (%p184) target = $region32
      $region31: #{tpu_custom_call.1} parent=5 // pred_region
        %s188 = ssub.s32 %s16, 1
        %s189 = sand.u32 %s43, 1
        %s190 = scalar_lea.sflag [#allocation3], %s189
        %s191 = sand.u32 %s43, 1
        %s192 = smul.addr %s191, 64
        %s193 = scalar_lea.vmem [#allocation2], %s192
        // Predicated region
        $region33: #{tpu_custom_call.1} parent=31 // pred_check
          %p194 = pneg %p56
        $region34: #{tpu_custom_call.1} parent=31 // pred_check_branch
          %196 = sbr.rel (%p194) target = $region36
        $region35: #{tpu_custom_call.1} parent=31 // pred_region
          %197 = dma.done %s190, 1024
        $region36: #{tpu_custom_call.1} parent=31 // pred_fallthru
          _
        // Predicated region
        $region37: #{tpu_custom_call.1} parent=31 // pred_check
          %p198 = pneg %p77
        $region38: #{tpu_custom_call.1} parent=31 // pred_check_branch
          %200 = sbr.rel (%p198) target = $region40
        $region39: #{tpu_custom_call.1} parent=31 // pred_region
          %201 = dma.done [#allocation6], 512
        $region40: #{tpu_custom_call.1} parent=31 // pred_fallthru
          _
        %s202 = sand.u32 %s43, 1
        %s203 = scalar_lea.sflag [#allocation3], %s202
        %s204 = sand.u32 %s43, 1
        %s205 = smul.addr %s204, 64
        %s206 = scalar_lea.vmem [#allocation2], %s205
        %p207 = pneg %p56
        %p208 = pneg %p53
        %p209 = pneg %p77
        %p210 = pneg %p74
        %p211 = pneg %p98
        %p212 = pneg %p95
        %p213 = pneg %p126
        %p214 = pneg %p123
        %s215 = sand.u32 %s113, 1
        %s216 = scalar_lea.sflag [#allocation4], %s215
        %s217 = sand.u32 %s113, 1
        %s218 = smul.addr %s217, 256
        %s219 = scalar_lea.vmem [#allocation7], %s218
        %s220 = smul.u32 8, %s26
        %s221 = sadd.s32 %s25, %s26
        %s222 = smul.u32 8, %s221
        %v223 = vld [vmem:[%s193] sm:$0xff]
        %v224 = vld [vmem:[%s193 + $0x8] sm:$0xff]
        %v225 = vld [vmem:[%s193 + $0x10] sm:$0xff]
        %v226 = vld [vmem:[%s193 + $0x18] sm:$0xff]
        %v227 = vld [vmem:[%s193 + $0x20] sm:$0xff]
        %v228 = vld [vmem:[%s193 + $0x28] sm:$0xff]
        %v229 = vld [vmem:[%s193 + $0x30] sm:$0xff]
        %v230 = vld [vmem:[%s193 + $0x38] sm:$0xff]
        %v231 = vld [vmem:[%s2] sm:$0x3]
        %v232 = vld [vmem:[#allocation5] sm:$0xff]
        %v233 = vld [vmem:[#allocation5 + $0x8] sm:$0xff]
        %v234 = vld [vmem:[#allocation5 + $0x10] sm:$0xff]
        %v235 = vld [vmem:[#allocation5 + $0x18] sm:$0xff]
        %vm236 = vcmask 64512
        %v238 = vsel %vm236, %v223, 0
        %v241 = vsel %vm236, %v224, 0
        %v244 = vsel %vm236, %v225, 0
        %v247 = vsel %vm236, %v226, 0
        %v250 = vsel %vm236, %v227, 0
        %v253 = vsel %vm236, %v228, 0
        %v256 = vsel %vm236, %v229, 0
        %v259 = vsel %vm236, %v230, 0
        %261 = vmatprep.subr.mxu0 %v233
        %262 = vmatpush1.msra.mxu0 %v232
        %263 = vmatprep.subr.mxu0 0.0
        %264 = vmatpush1.msra.mxu0 0.0
        %265 = vmatprep.subr.mxu0 0.0
        %266 = vmatpush1.msra.mxu0 0.0
        %267 = vmatprep.subr.mxu0 0.0
        %268 = vmatpush1.msra.mxu0 0.0
        %269 = vmatprep.subr.mxu0 0.0
        %270 = vmatpush1.msra.mxu0 0.0
        %271 = vmatprep.subr.mxu0 0.0
        %272 = vmatpush1.msra.mxu0 0.0
        %273 = vmatprep.subr.mxu0 0.0
        %274 = vmatpush1.msra.mxu0 0.0
        %275 = vmatprep.subr.mxu0 0.0
        %276 = vmatpush1.msra.mxu0 0.0
        %277 = vmatprep.subr.mxu0 0.0
        %278 = vmatpush1.msra.mxu0 0.0
        %279 = vmatprep.subr.mxu0 0.0
        %280 = vmatpush1.msra.mxu0 0.0
        %281 = vmatprep.subr.mxu0 0.0
        %282 = vmatpush1.msra.mxu0 0.0
        %283 = vmatprep.subr.mxu0 0.0
        %284 = vmatpush1.msra.mxu0 0.0
        %285 = vmatprep.subr.mxu0 0.0
        %286 = vmatpush1.msra.mxu0 0.0
        %287 = vmatprep.subr.mxu0 0.0
        %288 = vmatpush1.msra.mxu0 0.0
        %289 = vmatprep.subr.mxu0 0.0
        %290 = vmatpush1.msra.mxu0 0.0
        %291 = vmatprep.subr.mxu0 0.0
        %292 = vmatpush1.msra.mxu0 0.0
        %293 = vmatprep.subr.mxu0 0.0
        %294 = vmatpush1.msra.mxu0 0.0
        %295 = vmatprep.subr.mxu0 0.0
        %296 = vmatpush1.msra.mxu0 0.0
        %297 = vmatprep.subr.mxu0 0.0
        %298 = vmatpush1.msra.mxu0 0.0
        %299 = vmatprep.subr.mxu0 0.0
        %300 = vmatpush1.msra.mxu0 0.0
        %301 = vmatprep.subr.mxu0 0.0
        %302 = vmatpush1.msra.mxu0 0.0
        %303 = vmatprep.subr.mxu0 0.0
        %304 = vmatpush1.msra.mxu0 0.0
        %305 = vmatprep.subr.mxu0 0.0
        %306 = vmatpush1.msra.mxu0 0.0
        %307 = vmatprep.subr.mxu0 0.0
        %308 = vmatpush1.msra.mxu0 0.0
        %309 = vmatprep.subr.mxu0 0.0
        %310 = vmatpush1.msra.mxu0 0.0
        %311 = vmatprep.subr.mxu0 0.0
        %312 = vmatpush1.msra.mxu0 0.0
        %313 = vmatprep.subr.mxu0 0.0
        %314 = vmatpush1.msra.mxu0 0.0
        %315 = vmatprep.subr.mxu0 0.0
        %316 = vmatpush1.msra.mxu0 0.0
        %317 = vmatprep.subr.mxu0 0.0
        %318 = vmatpush1.msra.mxu0 0.0
        %319 = vmatprep.subr.mxu0 0.0
        %320 = vmatpush1.msra.mxu0 0.0
        %321 = vmatprep.subr.mxu0 0.0
        %322 = vmatpush1.msra.mxu0 0.0
        %323 = vmatprep.subr.mxu0 0.0
        %324 = vmatpush1.msra.mxu0 0.0
        %325 = vmatprep.mubr.f32.mxu0 0.0
        %326 = vmatmul.mubr.f32.gmra.mrb[0].mxu0 %v238
        %v327 = vpop.f32.mrb[0].mxu0
        %v328 = vadd.f32 0.0, %v327
        %v329 = vpop.f32.mrb[0].mxu0
        %v330 = vadd.f32 0.0, %v329
        %331 = vmatprep.mubr.f32.mxu0 0.0
        %332 = vmatmul.mubr.f32.gmra.mrb[0].mxu0 %v241
        %v333 = vpop.f32.mrb[0].mxu0
        %v334 = vadd.f32 0.0, %v333
        %v335 = vpop.f32.mrb[0].mxu0
        %v336 = vadd.f32 0.0, %v335
        %337 = vmatprep.mubr.f32.mxu0 0.0
        %338 = vmatmul.mubr.f32.gmra.mrb[0].mxu0 %v244
        %v339 = vpop.f32.mrb[0].mxu0
        %v340 = vadd.f32 0.0, %v339
        %v341 = vpop.f32.mrb[0].mxu0
        %v342 = vadd.f32 0.0, %v341
        %343 = vmatprep.mubr.f32.mxu0 0.0
        %344 = vmatmul.mubr.f32.gmra.mrb[0].mxu0 %v247
        %v345 = vpop.f32.mrb[0].mxu0
        %v346 = vadd.f32 0.0, %v345
        %v347 = vpop.f32.mrb[0].mxu0
        %v348 = vadd.f32 0.0, %v347
        %349 = vmatprep.mubr.f32.mxu0 0.0
        %350 = vmatmul.mubr.f32.gmra.mrb[0].mxu0 %v250
        %v351 = vpop.f32.mrb[0].mxu0
        %v352 = vadd.f32 0.0, %v351
        %v353 = vpop.f32.mrb[0].mxu0
        %v354 = vadd.f32 0.0, %v353
        %355 = vmatprep.mubr.f32.mxu0 0.0
        %356 = vmatmul.mubr.f32.gmra.mrb[0].mxu0 %v253
        %v357 = vpop.f32.mrb[0].mxu0
        %v358 = vadd.f32 0.0, %v357
        %v359 = vpop.f32.mrb[0].mxu0
        %v360 = vadd.f32 0.0, %v359
        %361 = vmatprep.mubr.f32.mxu0 0.0
        %362 = vmatmul.mubr.f32.gmra.mrb[0].mxu0 %v256
        %v363 = vpop.f32.mrb[0].mxu0
        %v364 = vadd.f32 0.0, %v363
        %v365 = vpop.f32.mrb[0].mxu0
        %v366 = vadd.f32 0.0, %v365
        %367 = vmatprep.mubr.f32.mxu0 0.0
        %368 = vmatmul.mubr.f32.gmra.mrb[0].mxu0 %v259
        %v369 = vpop.f32.mrb[0].mxu0
        %v370 = vadd.f32 0.0, %v369
        %v371 = vpop.f32.mrb[0].mxu0
        %v372 = vadd.f32 0.0, %v371
        %373 = vdwg.mxu0
        %374 = vmatprep.subr.mxu0 %v235
        %375 = vmatpush1.msra.mxu0 %v234
        %376 = vmatprep.subr.mxu0 0.0
        %377 = vmatpush1.msra.mxu0 0.0
        %378 = vmatprep.subr.mxu0 0.0
        %379 = vmatpush1.msra.mxu0 0.0
        %380 = vmatprep.subr.mxu0 0.0
        %381 = vmatpush1.msra.mxu0 0.0
        %382 = vmatprep.subr.mxu0 0.0
        %383 = vmatpush1.msra.mxu0 0.0
        %384 = vmatprep.subr.mxu0 0.0
        %385 = vmatpush1.msra.mxu0 0.0
        %386 = vmatprep.subr.mxu0 0.0
        %387 = vmatpush1.msra.mxu0 0.0
        %388 = vmatprep.subr.mxu0 0.0
        %389 = vmatpush1.msra.mxu0 0.0
        %390 = vmatprep.subr.mxu0 0.0
        %391 = vmatpush1.msra.mxu0 0.0
        %392 = vmatprep.subr.mxu0 0.0
        %393 = vmatpush1.msra.mxu0 0.0
        %394 = vmatprep.subr.mxu0 0.0
        %395 = vmatpush1.msra.mxu0 0.0
        %396 = vmatprep.subr.mxu0 0.0
        %397 = vmatpush1.msra.mxu0 0.0
        %398 = vmatprep.subr.mxu0 0.0
        %399 = vmatpush1.msra.mxu0 0.0
        %400 = vmatprep.subr.mxu0 0.0
        %401 = vmatpush1.msra.mxu0 0.0
        %402 = vmatprep.subr.mxu0 0.0
        %403 = vmatpush1.msra.mxu0 0.0
        %404 = vmatprep.subr.mxu0 0.0
        %405 = vmatpush1.msra.mxu0 0.0
        %406 = vmatprep.subr.mxu0 0.0
        %407 = vmatpush1.msra.mxu0 0.0
        %408 = vmatprep.subr.mxu0 0.0
        %409 = vmatpush1.msra.mxu0 0.0
        %410 = vmatprep.subr.mxu0 0.0
        %411 = vmatpush1.msra.mxu0 0.0
        %412 = vmatprep.subr.mxu0 0.0
        %413 = vmatpush1.msra.mxu0 0.0
        %414 = vmatprep.subr.mxu0 0.0
        %415 = vmatpush1.msra.mxu0 0.0
        %416 = vmatprep.subr.mxu0 0.0
        %417 = vmatpush1.msra.mxu0 0.0
        %418 = vmatprep.subr.mxu0 0.0
        %419 = vmatpush1.msra.mxu0 0.0
        %420 = vmatprep.subr.mxu0 0.0
        %421 = vmatpush1.msra.mxu0 0.0
        %422 = vmatprep.subr.mxu0 0.0
        %423 = vmatpush1.msra.mxu0 0.0
        %424 = vmatprep.subr.mxu0 0.0
        %425 = vmatpush1.msra.mxu0 0.0
        %426 = vmatprep.subr.mxu0 0.0
        %427 = vmatpush1.msra.mxu0 0.0
        %428 = vmatprep.subr.mxu0 0.0
        %429 = vmatpush1.msra.mxu0 0.0
        %430 = vmatprep.subr.mxu0 0.0
        %431 = vmatpush1.msra.mxu0 0.0
        %432 = vmatprep.subr.mxu0 0.0
        %433 = vmatpush1.msra.mxu0 0.0
        %434 = vmatprep.subr.mxu0 0.0
        %435 = vmatpush1.msra.mxu0 0.0
        %436 = vmatprep.subr.mxu0 0.0
        %437 = vmatpush1.msra.mxu0 0.0
        %438 = vmatprep.mubr.f32.mxu0 0.0
        %439 = vmatmul.mubr.f32.gmra.mrb[0].mxu0 %v238
        %v440 = vpop.f32.mrb[0].mxu0
        %v441 = vadd.f32 0.0, %v440
        %v442 = vpop.f32.mrb[0].mxu0
        %v443 = vadd.f32 0.0, %v442
        %444 = vmatprep.mubr.f32.mxu0 0.0
        %445 = vmatmul.mubr.f32.gmra.mrb[0].mxu0 %v241
        %v446 = vpop.f32.mrb[0].mxu0
        %v447 = vadd.f32 0.0, %v446
        %v448 = vpop.f32.mrb[0].mxu0
        %v449 = vadd.f32 0.0, %v448
        %450 = vmatprep.mubr.f32.mxu0 0.0
        %451 = vmatmul.mubr.f32.gmra.mrb[0].mxu0 %v244
        %v452 = vpop.f32.mrb[0].mxu0
        %v453 = vadd.f32 0.0, %v452
        %v454 = vpop.f32.mrb[0].mxu0
        %v455 = vadd.f32 0.0, %v454
        %456 = vmatprep.mubr.f32.mxu0 0.0
        %457 = vmatmul.mubr.f32.gmra.mrb[0].mxu0 %v247
        %v458 = vpop.f32.mrb[0].mxu0
        %v459 = vadd.f32 0.0, %v458
        %v460 = vpop.f32.mrb[0].mxu0
        %v461 = vadd.f32 0.0, %v460
        %462 = vmatprep.mubr.f32.mxu0 0.0
        %463 = vmatmul.mubr.f32.gmra.mrb[0].mxu0 %v250
        %v464 = vpop.f32.mrb[0].mxu0
        %v465 = vadd.f32 0.0, %v464
        %v466 = vpop.f32.mrb[0].mxu0
        %v467 = vadd.f32 0.0, %v466
        %468 = vmatprep.mubr.f32.mxu0 0.0
        %469 = vmatmul.mubr.f32.gmra.mrb[0].mxu0 %v253
        %v470 = vpop.f32.mrb[0].mxu0
        %v471 = vadd.f32 0.0, %v470
        %v472 = vpop.f32.mrb[0].mxu0
        %v473 = vadd.f32 0.0, %v472
        %474 = vmatprep.mubr.f32.mxu0 0.0
        %475 = vmatmul.mubr.f32.gmra.mrb[0].mxu0 %v256
        %v476 = vpop.f32.mrb[0].mxu0
        %v477 = vadd.f32 0.0, %v476
        %v478 = vpop.f32.mrb[0].mxu0
        %v479 = vadd.f32 0.0, %v478
        %480 = vmatprep.mubr.f32.mxu0 0.0
        %481 = vmatmul.mubr.f32.gmra.mrb[0].mxu0 %v259
        %v482 = vpop.f32.mrb[0].mxu0
        %v483 = vadd.f32 0.0, %v482
        %v484 = vpop.f32.mrb[0].mxu0
        %v485 = vadd.f32 0.0, %v484
        %486 = vdwg.mxu0
        %v488 = vlaneseq
        %v489 = vshrl.u32 %v488, 7
        %v490 = vsub.s32 0, %v489
        %v491 = vrot.slane %v231, %v490
        %v492 = vlaneseq
        %v493 = vshrl.u32 %v492, 7
        %v494 = vsub.s32 1, %v493
        %v495 = vrot.slane %v231, %v494
        %v498 = vadd.f32 %v328, %v491
        %v499 = vadd.f32 %v330, %v495
        %v500 = vadd.f32 %v334, %v491
        %v501 = vadd.f32 %v336, %v495
        %v502 = vadd.f32 %v340, %v491
        %v503 = vadd.f32 %v342, %v495
        %v504 = vadd.f32 %v346, %v491
        %v505 = vadd.f32 %v348, %v495
        %v506 = vadd.f32 %v352, %v491
        %v507 = vadd.f32 %v354, %v495
        %v508 = vadd.f32 %v358, %v491
        %v509 = vadd.f32 %v360, %v495
        %v510 = vadd.f32 %v364, %v491
        %v511 = vadd.f32 %v366, %v495
        %v512 = vadd.f32 %v370, %v491
        %v513 = vadd.f32 %v372, %v495
        %v530 = vcombine.low %v498, %v499
        %v531 = vcombine.high %v498, %v499
        %v532 = vcombine.low %v500, %v501
        %v533 = vcombine.high %v500, %v501
        %v534 = vcombine.low %v502, %v503
        %v535 = vcombine.high %v502, %v503
        %v536 = vcombine.low %v504, %v505
        %v537 = vcombine.high %v504, %v505
        %v538 = vcombine.low %v506, %v507
        %v539 = vcombine.high %v506, %v507
        %v540 = vcombine.low %v508, %v509
        %v541 = vcombine.high %v508, %v509
        %v542 = vcombine.low %v510, %v511
        %v543 = vcombine.high %v510, %v511
        %v544 = vcombine.low %v512, %v513
        %v545 = vcombine.high %v512, %v513
        %v563 = vunpack.c.l.s4 1935823168
        %v564 = vunpack.c.0.s8 %v563
        %v565 = vlaneseq
        %v566 = vshrl.u32 %v565, 7
        %v567 = vsub.s32 %v564, %v566
        %v568 = vrot.slane %v530, %v567
        %v570 = vunpack.c.l.s4 1935823168
        %v571 = vunpack.c.0.s8 %v570
        %v572 = vlaneseq
        %v573 = vshrl.u32 %v572, 7
        %v574 = vsub.s32 %v571, %v573
        %v575 = vrot.slane %v531, %v574
        %v577 = vunpack.c.l.s4 1935823168
        %v578 = vunpack.c.0.s8 %v577
        %v579 = vlaneseq
        %v580 = vshrl.u32 %v579, 7
        %v581 = vsub.s32 %v578, %v580
        %v582 = vrot.slane %v532, %v581
        %v584 = vunpack.c.l.s4 1935823168
        %v585 = vunpack.c.0.s8 %v584
        %v586 = vlaneseq
        %v587 = vshrl.u32 %v586, 7
        %v588 = vsub.s32 %v585, %v587
        %v589 = vrot.slane %v533, %v588
        %v591 = vunpack.c.l.s4 1935823168
        %v592 = vunpack.c.0.s8 %v591
        %v593 = vlaneseq
        %v594 = vshrl.u32 %v593, 7
        %v595 = vsub.s32 %v592, %v594
        %v596 = vrot.slane %v534, %v595
        %v598 = vunpack.c.l.s4 1935823168
        %v599 = vunpack.c.0.s8 %v598
        %v600 = vlaneseq
        %v601 = vshrl.u32 %v600, 7
        %v602 = vsub.s32 %v599, %v601
        %v603 = vrot.slane %v535, %v602
        %v605 = vunpack.c.l.s4 1935823168
        %v606 = vunpack.c.0.s8 %v605
        %v607 = vlaneseq
        %v608 = vshrl.u32 %v607, 7
        %v609 = vsub.s32 %v606, %v608
        %v610 = vrot.slane %v536, %v609
        %v612 = vunpack.c.l.s4 1935823168
        %v613 = vunpack.c.0.s8 %v612
        %v614 = vlaneseq
        %v615 = vshrl.u32 %v614, 7
        %v616 = vsub.s32 %v613, %v615
        %v617 = vrot.slane %v537, %v616
        %v619 = vunpack.c.l.s4 1935823168
        %v620 = vunpack.c.0.s8 %v619
        %v621 = vlaneseq
        %v622 = vshrl.u32 %v621, 7
        %v623 = vsub.s32 %v620, %v622
        %v624 = vrot.slane %v538, %v623
        %v626 = vunpack.c.l.s4 1935823168
        %v627 = vunpack.c.0.s8 %v626
        %v628 = vlaneseq
        %v629 = vshrl.u32 %v628, 7
        %v630 = vsub.s32 %v627, %v629
        %v631 = vrot.slane %v539, %v630
        %v633 = vunpack.c.l.s4 1935823168
        %v634 = vunpack.c.0.s8 %v633
        %v635 = vlaneseq
        %v636 = vshrl.u32 %v635, 7
        %v637 = vsub.s32 %v634, %v636
        %v638 = vrot.slane %v540, %v637
        %v640 = vunpack.c.l.s4 1935823168
        %v641 = vunpack.c.0.s8 %v640
        %v642 = vlaneseq
        %v643 = vshrl.u32 %v642, 7
        %v644 = vsub.s32 %v641, %v643
        %v645 = vrot.slane %v541, %v644
        %v647 = vunpack.c.l.s4 1935823168
        %v648 = vunpack.c.0.s8 %v647
        %v649 = vlaneseq
        %v650 = vshrl.u32 %v649, 7
        %v651 = vsub.s32 %v648, %v650
        %v652 = vrot.slane %v542, %v651
        %v654 = vunpack.c.l.s4 1935823168
        %v655 = vunpack.c.0.s8 %v654
        %v656 = vlaneseq
        %v657 = vshrl.u32 %v656, 7
        %v658 = vsub.s32 %v655, %v657
        %v659 = vrot.slane %v543, %v658
        %v661 = vunpack.c.l.s4 1935823168
        %v662 = vunpack.c.0.s8 %v661
        %v663 = vlaneseq
        %v664 = vshrl.u32 %v663, 7
        %v665 = vsub.s32 %v662, %v664
        %v666 = vrot.slane %v544, %v665
        %v668 = vunpack.c.l.s4 1935823168
        %v669 = vunpack.c.0.s8 %v668
        %v670 = vlaneseq
        %v671 = vshrl.u32 %v670, 7
        %v672 = vsub.s32 %v669, %v671
        %v673 = vrot.slane %v545, %v672
        %674 = vst [vmem:[%s219] sm:$0xff] %v568
        %675 = vst [vmem:[%s219 + $0x8] sm:$0xff] %v575
        %676 = vst [vmem:[%s219 + $0x20] sm:$0xff] %v582
        %677 = vst [vmem:[%s219 + $0x28] sm:$0xff] %v589
        %678 = vst [vmem:[%s219 + $0x40] sm:$0xff] %v596
        %679 = vst [vmem:[%s219 + $0x48] sm:$0xff] %v603
        %680 = vst [vmem:[%s219 + $0x60] sm:$0xff] %v610
        %681 = vst [vmem:[%s219 + $0x68] sm:$0xff] %v617
        %682 = vst [vmem:[%s219 + $0x80] sm:$0xff] %v624
        %683 = vst [vmem:[%s219 + $0x88] sm:$0xff] %v631
        %684 = vst [vmem:[%s219 + $0xa0] sm:$0xff] %v638
        %685 = vst [vmem:[%s219 + $0xa8] sm:$0xff] %v645
        %686 = vst [vmem:[%s219 + $0xc0] sm:$0xff] %v652
        %687 = vst [vmem:[%s219 + $0xc8] sm:$0xff] %v659
        %688 = vst [vmem:[%s219 + $0xe0] sm:$0xff] %v666
        %689 = vst [vmem:[%s219 + $0xe8] sm:$0xff] %v673
        %v690 = vadd.f32 %v441, %v491
        %v691 = vadd.f32 %v443, %v495
        %v692 = vadd.f32 %v447, %v491
        %v693 = vadd.f32 %v449, %v495
        %v694 = vadd.f32 %v453, %v491
        %v695 = vadd.f32 %v455, %v495
        %v696 = vadd.f32 %v459, %v491
        %v697 = vadd.f32 %v461, %v495
        %v698 = vadd.f32 %v465, %v491
        %v699 = vadd.f32 %v467, %v495
        %v700 = vadd.f32 %v471, %v491
        %v701 = vadd.f32 %v473, %v495
        %v702 = vadd.f32 %v477, %v491
        %v703 = vadd.f32 %v479, %v495
        %v704 = vadd.f32 %v483, %v491
        %v705 = vadd.f32 %v485, %v495
        %v722 = vcombine.low %v690, %v691
        %v723 = vcombine.high %v690, %v691
        %v724 = vcombine.low %v692, %v693
        %v725 = vcombine.high %v692, %v693
        %v726 = vcombine.low %v694, %v695
        %v727 = vcombine.high %v694, %v695
        %v728 = vcombine.low %v696, %v697
        %v729 = vcombine.high %v696, %v697
        %v730 = vcombine.low %v698, %v699
        %v731 = vcombine.high %v698, %v699
        %v732 = vcombine.low %v700, %v701
        %v733 = vcombine.high %v700, %v701
        %v734 = vcombine.low %v702, %v703
        %v735 = vcombine.high %v702, %v703
        %v736 = vcombine.low %v704, %v705
        %v737 = vcombine.high %v704, %v705
        %v755 = vunpack.c.l.s4 1935823168
        %v756 = vunpack.c.0.s8 %v755
        %v757 = vlaneseq
        %v758 = vshrl.u32 %v757, 7
        %v759 = vsub.s32 %v756, %v758
        %v760 = vrot.slane %v722, %v759
        %v762 = vunpack.c.l.s4 1935823168
        %v763 = vunpack.c.0.s8 %v762
        %v764 = vlaneseq
        %v765 = vshrl.u32 %v764, 7
        %v766 = vsub.s32 %v763, %v765
        %v767 = vrot.slane %v723, %v766
        %v769 = vunpack.c.l.s4 1935823168
        %v770 = vunpack.c.0.s8 %v769
        %v771 = vlaneseq
        %v772 = vshrl.u32 %v771, 7
        %v773 = vsub.s32 %v770, %v772
        %v774 = vrot.slane %v724, %v773
        %v776 = vunpack.c.l.s4 1935823168
        %v777 = vunpack.c.0.s8 %v776
        %v778 = vlaneseq
        %v779 = vshrl.u32 %v778, 7
        %v780 = vsub.s32 %v777, %v779
        %v781 = vrot.slane %v725, %v780
        %v783 = vunpack.c.l.s4 1935823168
        %v784 = vunpack.c.0.s8 %v783
        %v785 = vlaneseq
        %v786 = vshrl.u32 %v785, 7
        %v787 = vsub.s32 %v784, %v786
        %v788 = vrot.slane %v726, %v787
        %v790 = vunpack.c.l.s4 1935823168
        %v791 = vunpack.c.0.s8 %v790
        %v792 = vlaneseq
        %v793 = vshrl.u32 %v792, 7
        %v794 = vsub.s32 %v791, %v793
        %v795 = vrot.slane %v727, %v794
        %v797 = vunpack.c.l.s4 1935823168
        %v798 = vunpack.c.0.s8 %v797
        %v799 = vlaneseq
        %v800 = vshrl.u32 %v799, 7
        %v801 = vsub.s32 %v798, %v800
        %v802 = vrot.slane %v728, %v801
        %v804 = vunpack.c.l.s4 1935823168
        %v805 = vunpack.c.0.s8 %v804
        %v806 = vlaneseq
        %v807 = vshrl.u32 %v806, 7
        %v808 = vsub.s32 %v805, %v807
        %v809 = vrot.slane %v729, %v808
        %v811 = vunpack.c.l.s4 1935823168
        %v812 = vunpack.c.0.s8 %v811
        %v813 = vlaneseq
        %v814 = vshrl.u32 %v813, 7
        %v815 = vsub.s32 %v812, %v814
        %v816 = vrot.slane %v730, %v815
        %v818 = vunpack.c.l.s4 1935823168
        %v819 = vunpack.c.0.s8 %v818
        %v820 = vlaneseq
        %v821 = vshrl.u32 %v820, 7
        %v822 = vsub.s32 %v819, %v821
        %v823 = vrot.slane %v731, %v822
        %v825 = vunpack.c.l.s4 1935823168
        %v826 = vunpack.c.0.s8 %v825
        %v827 = vlaneseq
        %v828 = vshrl.u32 %v827, 7
        %v829 = vsub.s32 %v826, %v828
        %v830 = vrot.slane %v732, %v829
        %v832 = vunpack.c.l.s4 1935823168
        %v833 = vunpack.c.0.s8 %v832
        %v834 = vlaneseq
        %v835 = vshrl.u32 %v834, 7
        %v836 = vsub.s32 %v833, %v835
        %v837 = vrot.slane %v733, %v836
        %v839 = vunpack.c.l.s4 1935823168
        %v840 = vunpack.c.0.s8 %v839
        %v841 = vlaneseq
        %v842 = vshrl.u32 %v841, 7
        %v843 = vsub.s32 %v840, %v842
        %v844 = vrot.slane %v734, %v843
        %v846 = vunpack.c.l.s4 1935823168
        %v847 = vunpack.c.0.s8 %v846
        %v848 = vlaneseq
        %v849 = vshrl.u32 %v848, 7
        %v850 = vsub.s32 %v847, %v849
        %v851 = vrot.slane %v735, %v850
        %v853 = vunpack.c.l.s4 1935823168
        %v854 = vunpack.c.0.s8 %v853
        %v855 = vlaneseq
        %v856 = vshrl.u32 %v855, 7
        %v857 = vsub.s32 %v854, %v856
        %v858 = vrot.slane %v736, %v857
        %v860 = vunpack.c.l.s4 1935823168
        %v861 = vunpack.c.0.s8 %v860
        %v862 = vlaneseq
        %v863 = vshrl.u32 %v862, 7
        %v864 = vsub.s32 %v861, %v863
        %v865 = vrot.slane %v737, %v864
        %s866 = scalar_lea.vmem %s219, 16 [#allocation7]
        %867 = vst [vmem:[%s866] sm:$0xff] %v760
        %868 = vst [vmem:[%s866 + $0x8] sm:$0xff] %v767
        %869 = vst [vmem:[%s866 + $0x20] sm:$0xff] %v774
        %870 = vst [vmem:[%s866 + $0x28] sm:$0xff] %v781
        %871 = vst [vmem:[%s866 + $0x40] sm:$0xff] %v788
        %872 = vst [vmem:[%s866 + $0x48] sm:$0xff] %v795
        %873 = vst [vmem:[%s866 + $0x60] sm:$0xff] %v802
        %874 = vst [vmem:[%s866 + $0x68] sm:$0xff] %v809
        %875 = vst [vmem:[%s866 + $0x80] sm:$0xff] %v816
        %876 = vst [vmem:[%s866 + $0x88] sm:$0xff] %v823
        %877 = vst [vmem:[%s866 + $0xa0] sm:$0xff] %v830
        %878 = vst [vmem:[%s866 + $0xa8] sm:$0xff] %v837
        %879 = vst [vmem:[%s866 + $0xc0] sm:$0xff] %v844
        %880 = vst [vmem:[%s866 + $0xc8] sm:$0xff] %v851
        %881 = vst [vmem:[%s866 + $0xe0] sm:$0xff] %v858
        %882 = vst [vmem:[%s866 + $0xe8] sm:$0xff] %v865
        %s883 = sand.u32 %s113, 1
        %s884 = scalar_lea.sflag [#allocation4], %s883
        %s885 = sand.u32 %s113, 1
        %s886 = smul.addr %s885, 256
        %s887 = scalar_lea.vmem [#allocation7], %s886
        // Predicated region
        $region41: #{tpu_custom_call.1} parent=31 // pred_check
          %p888 = pneg %p123
        $region42: #{tpu_custom_call.1} parent=31 // pred_check_branch
          %890 = sbr.rel (%p888) target = $region44
        $region43: #{tpu_custom_call.1} parent=31 // pred_region
          %s891 = sadd.s32 %s25, %s26
          %s892 = smul.u32 8, %s891
          %s894 = ssub.s32 4096, 4096
          %895 = vsyncadd %s884, %s894
          %s896 = smul.addr %s892, 4
          %s897 = smul.addr %s896, 128
          %s898 = scalar_lea.hbm %s3, %s897
          %s899 = sshll.u32 %s887, 4
          %s900 = int_to_ptr.vmem [resolvable:$true] %s899
          %905 = dma.vmem_to_hbm [thread:$0]  %s900, 4096, %s898, %s884, 128, 128, 8
        $region44: #{tpu_custom_call.1} parent=31 // pred_fallthru
          _
      $region32: #{tpu_custom_call.1} parent=5 // pred_fallthru
        _
      %p906 = scmp.le.s32.totalorder 2, %s16
      // Predicated region
      $region45: #{tpu_custom_call.1} parent=5 // pred_check
        %p907 = pneg %p906
      $region46: #{tpu_custom_call.1} parent=5 // pred_check_branch
        %909 = sbr.rel (%p907) target = $region48
      $region47: #{tpu_custom_call.1} parent=5 // pred_region
        %s910 = ssub.s32 %s16, 2
        // Predicated region
        $region49: #{tpu_custom_call.1} parent=47 // pred_check
          %p911 = pneg %p129
        $region50: #{tpu_custom_call.1} parent=47 // pred_check_branch
          %913 = sbr.rel (%p911) target = $region52
        $region51: #{tpu_custom_call.1} parent=47 // pred_region
          %s914 = sand.u32 %s114, 1
          %s915 = scalar_lea.sflag [#allocation4], %s914
          %s916 = sand.u32 %s114, 1
          %s917 = smul.addr %s916, 256
          %s918 = scalar_lea.vmem [#allocation7], %s917
          %919 = dma.done %s915, 4096
        $region52: #{tpu_custom_call.1} parent=47 // pred_fallthru
          _
      $region48: #{tpu_custom_call.1} parent=5 // pred_fallthru
        _
    $region6: #{tpu_custom_call.1} parent=1 // loop_footer
      %s20 = sadd.s32 1, %s16
    $region7: #{tpu_custom_call.1} parent=1 // loop_footer_branch
      %15 = sbr.rel target = $region3
    $region8: #{tpu_custom_call.1} parent=1 // loop_exit
      _
    %920 = vsyncpa [#allocation3], 1
    %s921 = scalar_lea.sflag [#allocation3], 1
    %922 = vsyncpa %s921, 1
    %923 = vsyncpa [#allocation6], 1
    %924 = vsyncpa [#allocation4], 1
    %s925 = scalar_lea.sflag [#allocation4], 1
    %926 = vsyncpa %s925, 1

</llo_original>
